<compile_context>
chip_gen: v7x
topology: tpu7x:2x2x1
jax: 0.10.0
libtpu: 0.0.40
codegen_flags: <defaults>
</compile_context>

<pallas_src>
import functools
import math

import jax
import jax.numpy as jnp
from jax import lax
from jax.experimental import pallas as pl
from jax.experimental.pallas import tpu as pltpu

_MIB = 1 << 20
_FAST_PATH_BYTES = 1 * _MIB          # single-block (no pipeline) only below this
_JNP_FALLBACK_BYTES = 256 << 10      # tiny tensors: let XLA fuse a plain mean


@functools.lru_cache(maxsize=1)
def _vmem_config():
    """(per-input-block budget, explicit scoped-VMEM limit), generation aware."""
    phys = None
    try:
        info = pltpu.get_tpu_info()
        for attr in ("vmem_capacity_bytes", "vmem_size_bytes", "vmem_bytes"):
            if hasattr(info, attr):
                phys = int(getattr(info, attr))
                break
    except Exception:
        phys = None
    if not phys or phys <= 0:
        phys = 64 * _MIB  # conservative default: v7x per-TensorCore VMEM
    # Input blocks are double-buffered; leave room for the (double-buffered) output
    # block and compiler scratch:  v5e/v6e (128 MiB) -> ~21 MiB blocks / 96 MiB limit,
    # v7x (64 MiB) -> ~10 MiB blocks / 48 MiB limit.
    block_budget = max(2 * _MIB, phys // 6)
    vmem_limit = int(min(phys * 3 // 4, 96 * _MIB))
    return block_budget, vmem_limit


def _sublane_pack(itemsize: int) -> int:
    # Rows per packed sublane tile: f32 -> 8, bf16 -> 16, int8/fp8 -> 32.
    return max(8, 32 // max(1, itemsize))


def _choose_m_tile(m, row_bytes, pack, budget):
    """Rows per block when keeping the whole reduction axis in VMEM.

    Returns None if even a minimal block exceeds the budget (-> R tiling needed)."""
    if m <= pack:
        return m if m * row_bytes <= budget else None
    by_budget = (budget // max(1, row_bytes)) // pack * pack
    if by_budget < pack:
        return None
    # Aim for >= ~4 grid steps: overlaps DMA with compute and gives the "parallel"
    # M axis >= 2 steps to shard across v7x's two TensorCores.
    by_steps = math.ceil(math.ceil(m / 4) / pack) * pack
    return min(m, max(pack, min(by_budget, by_steps)))


# ---------------------------------------------------------------------------
# Kernels
# ---------------------------------------------------------------------------

def _mean_axis1_kernel(x_ref, o_ref, *, inv_r):
    # x_ref: (tm, R, L) ; o_ref: (tm, L). Reduce the middle (sublane-direction) axis.
    acc = jnp.sum(x_ref[...].astype(jnp.float32), axis=1)
    o_ref[...] = (acc * inv_r).astype(o_ref.dtype)


def _mean_axis1_acc_kernel(x_ref, o_ref, acc_ref, *, inv_r, r_total, tr):
    # x_ref: (tm, tr, L) ; o_ref: (tm, L) ; acc_ref: f32 (tm, L) scratch.
    k = pl.program_id(1)

    @pl.when(k == 0)
    def _():
        acc_ref[...] = jnp.zeros_like(acc_ref)

    xb = x_ref[...].astype(jnp.float32)
    if r_total % tr != 0:  # static check: mask the padded tail of the reduction axis
        idx = lax.broadcasted_iota(jnp.int32, (1, tr, 1), 1) + k * tr
        xb = jnp.where(idx < r_total, xb, 0.0)
    acc_ref[...] += jnp.sum(xb, axis=1)

    @pl.when(k == pl.num_programs(1) - 1)
    def _():
        o_ref[...] = (acc_ref[...] * inv_r).astype(o_ref.dtype)


def _mean_last_kernel(x_ref, o_ref, *, inv_r):
    # x_ref: (tm, R) ; o_ref: (tm, 1). Reduce the lane axis.
    acc = jnp.sum(x_ref[...].astype(jnp.float32), axis=-1, keepdims=True)
    o_ref[...] = (acc * inv_r).astype(o_ref.dtype)


def _mean_last_acc_kernel(x_ref, o_ref, acc_ref, *, inv_r, r_total, tr):
    # x_ref: (tm, tr) ; o_ref: (tm, 1) ; acc_ref: f32 (tm, 1) scratch.
    k = pl.program_id(1)

    @pl.when(k == 0)
    def _():
        acc_ref[...] = jnp.zeros_like(acc_ref)

    xb = x_ref[...].astype(jnp.float32)
    if r_total % tr != 0:
        idx = lax.broadcasted_iota(jnp.int32, (1, tr), 1) + k * tr
        xb = jnp.where(idx < r_total, xb, 0.0)
    acc_ref[...] += jnp.sum(xb, axis=-1, keepdims=True)

    @pl.when(k == pl.num_programs(1) - 1)
    def _():
        o_ref[...] = (acc_ref[...] * inv_r).astype(o_ref.dtype)


# ---------------------------------------------------------------------------
# Drivers
# ---------------------------------------------------------------------------

def _mean_over_middle(x3, M, R, L, inv_r, budget, vmem_limit):
    itemsize = x3.dtype.itemsize
    pack = _sublane_pack(itemsize)
    row_bytes = R * L * itemsize
    total_bytes = M * row_bytes
    out_sds = jax.ShapeDtypeStruct((M, L), x3.dtype)
    cost = pl.CostEstimate(flops=M * R * L, transcendentals=0,
                           bytes_accessed=total_bytes + M * L * itemsize)

    fast_bytes = min(_FAST_PATH_BYTES, budget)
    if total_bytes <= fast_bytes:
        return pl.pallas_call(
            functools.partial(_mean_axis1_kernel, inv_r=inv_r),
            out_shape=out_sds,
            grid=(),
            in_specs=[pl.BlockSpec((M, R, L), lambda: (0, 0, 0))],
            out_specs=pl.BlockSpec((M, L), lambda: (0, 0)),
            cost_estimate=cost,
        )(x3)

    tm = _choose_m_tile(M, row_bytes, pack, budget)
    if tm is not None:
        # Tile only the flattened leading axis; R stays whole, L stays lane-dense.
        return pl.pallas_call(
            functools.partial(_mean_axis1_kernel, inv_r=inv_r),
            out_shape=out_sds,
            grid=(pl.cdiv(M, tm),),
            in_specs=[pl.BlockSpec((tm, R, L), lambda i: (i, 0, 0))],
            out_specs=pl.BlockSpec((tm, L), lambda i: (i, 0)),
            compiler_params=pltpu.CompilerParams(
                dimension_semantics=("parallel",),
                vmem_limit_bytes=vmem_limit),
            cost_estimate=cost,
        )(x3)

    # Even a minimal row block over-runs the budget: tile the reduction axis too
    # (reduction axis last, "arbitrary") and accumulate into an f32 VMEM scratch.
    tm = min(M, pack)
    tr = (budget // max(1, tm * L * itemsize)) // pack * pack
    tr = max(pack, tr)
    tr = min(tr, R)
    # TODO(synk): if L alone is so large that (tm, pack, L) still exceeds the budget,
    # an additional L (lane) tiling pass would be needed; not hit by cultionet shapes.
    return pl.pallas_call(
        functools.partial(_mean_axis1_acc_kernel, inv_r=inv_r, r_total=R, tr=tr),
        out_shape=out_sds,
        grid=(pl.cdiv(M, tm), pl.cdiv(R, tr)),
        in_specs=[pl.BlockSpec((tm, tr, L), lambda i, k: (i, k, 0))],
        out_specs=pl.BlockSpec((tm, L), lambda i, k: (i, 0)),
        scratch_shapes=[pltpu.VMEM((tm, L), jnp.float32)],
        compiler_params=pltpu.CompilerParams(
            dimension_semantics=("parallel", "arbitrary"),
            vmem_limit_bytes=vmem_limit),
        cost_estimate=cost,
    )(x3)


def _mean_over_last(x2, M, R, inv_r, budget, vmem_limit):
    itemsize = x2.dtype.itemsize
    pack = _sublane_pack(itemsize)
    row_bytes = R * itemsize
    total_bytes = M * row_bytes
    out_sds = jax.ShapeDtypeStruct((M, 1), x2.dtype)
    cost = pl.CostEstimate(flops=M * R, transcendentals=0,
                           bytes_accessed=total_bytes + M * itemsize)

    fast_bytes = min(_FAST_PATH_BYTES, budget)
    if total_bytes <= fast_bytes:
        return pl.pallas_call(
            functools.partial(_mean_last_kernel, inv_r=inv_r),
            out_shape=out_sds,
            grid=(),
            in_specs=[pl.BlockSpec((M, R), lambda: (0, 0))],
            out_specs=pl.BlockSpec((M, 1), lambda: (0, 0)),
            cost_estimate=cost,
        )(x2)

    tm = _choose_m_tile(M, row_bytes, pack, budget)
    if tm is not None:
        return pl.pallas_call(
            functools.partial(_mean_last_kernel, inv_r=inv_r),
            out_shape=out_sds,
            grid=(pl.cdiv(M, tm),),
            in_specs=[pl.BlockSpec((tm, R), lambda i: (i, 0))],
            out_specs=pl.BlockSpec((tm, 1), lambda i: (i, 0)),
            compiler_params=pltpu.CompilerParams(
                dimension_semantics=("parallel",),
                vmem_limit_bytes=vmem_limit),
            cost_estimate=cost,
        )(x2)

    # Long reduction rows: tile R (lane axis) with an f32 accumulator.
    tm = min(M, pack)
    tr = (budget // max(1, tm * itemsize)) // 128 * 128
    tr = max(128, tr)
    tr = min(tr, R)
    return pl.pallas_call(
        functools.partial(_mean_last_acc_kernel, inv_r=inv_r, r_total=R, tr=tr),
        out_shape=out_sds,
        grid=(pl.cdiv(M, tm), pl.cdiv(R, tr)),
        in_specs=[pl.BlockSpec((tm, tr), lambda i, k: (i, k))],
        out_specs=pl.BlockSpec((tm, 1), lambda i, k: (i, 0)),
        scratch_shapes=[pltpu.VMEM((tm, 1), jnp.float32)],
        compiler_params=pltpu.CompilerParams(
            dimension_semantics=("parallel", "arbitrary"),
            vmem_limit_bytes=vmem_limit),
        cost_estimate=cost,
    )(x2)


# ---------------------------------------------------------------------------
# Public API
# ---------------------------------------------------------------------------

def mean_pallas(x: jax.Array, dim: int, keepdim: bool = False, *,
                min_pallas_bytes: int = _JNP_FALLBACK_BYTES,
                block_budget_bytes: int | None = None,
                vmem_limit_bytes: int | None = None) -> jax.Array:
    """Equivalent of torch.Tensor.mean(dim=dim, keepdim=keepdim)."""
    shape = tuple(x.shape)
    ndim = len(shape)
    d = dim % ndim
    R = shape[d]
    M = int(math.prod(shape[:d]))
    L = int(math.prod(shape[d + 1:]))
    inv_r = 1.0 / float(R)
    out_full = shape[:d] + ((1,) if keepdim else ()) + shape[d + 1:]

    total_bytes = int(x.size) * x.dtype.itemsize

    # Tiny tensors (the typical cultionet case) are dominated by kernel-launch overhead
    # and an un-fusable HBM round trip; a short trailing reduction axis (R < 128) would
    # also waste (128/R)x of every vreg / DMA burst.  Hand both to a fused XLA mean.
    # TODO(synk): a segmented lane reduction (pack 128/R groups per 128-lane row) would
    # keep the short-trailing-axis case in Pallas; not worthwhile at these sizes.
    if total_bytes < min_pallas_bytes or (L == 1 and R < 128):
        return jnp.mean(x.astype(jnp.float32), axis=d, keepdims=keepdim).astype(x.dtype)

    auto_budget, auto_limit = _vmem_config()
    budget = block_budget_bytes if block_budget_bytes is not None else auto_budget
    vmem_limit = vmem_limit_bytes if vmem_limit_bytes is not None else auto_limit

    if L == 1:
        out2 = _mean_over_last(x.reshape(M, R), M, R, inv_r, budget, vmem_limit)
    else:
        out2 = _mean_over_middle(x.reshape(M, R, L), M, R, L, inv_r, budget, vmem_limit)
    return out2.reshape(out_full)


class MeanPallas:
    """Mirror of cultionet.models.base_layers.Mean (no parameters)."""

    def __init__(self, dim: int, keepdim: bool = False, *,
                 min_pallas_bytes: int = _JNP_FALLBACK_BYTES,
                 block_budget_bytes: int | None = None,
                 vmem_limit_bytes: int | None = None):
        self.dim = dim
        self.keepdim = keepdim
        self.min_pallas_bytes = min_pallas_bytes
        self.block_budget_bytes = block_budget_bytes
        self.vmem_limit_bytes = vmem_limit_bytes

    def __call__(self, x: jax.Array) -> jax.Array:
        return mean_pallas(x, dim=self.dim, keepdim=self.keepdim,
                           min_pallas_bytes=self.min_pallas_bytes,
                           block_budget_bytes=self.block_budget_bytes,
                           vmem_limit_bytes=self.vmem_limit_bytes)


if __name__ == "__main__":
    key = jax.random.PRNGKey(0)
    k1, k2, k3, k4 = jax.random.split(key, 4)

    def check(y, ref, name, rtol=1e-5, atol=1e-5):
        assert y.shape == ref.shape, (name, y.shape, ref.shape)
        assert y.dtype == ref.dtype, (name, y.dtype, ref.dtype)
        ok = jnp.allclose(y.astype(jnp.float32), ref.astype(jnp.float32),
                          rtol=rtol, atol=atol)
        assert bool(ok), name

    # Canonical cultionet tensor: (batch=2, channels=4, height=16, width=16).
    x = jax.random.normal(k1, (2, 4, 16, 16), dtype=jnp.float32)

    # 1) Default dispatch (tiny tensor -> fused XLA mean), channel mean.
    y = jax.block_until_ready(MeanPallas(dim=1)(x))
    check(y, jnp.mean(x, axis=1), "default-small")

    # 2) Force the Pallas grid-less middle-axis path; keepdim both ways.
    y = jax.block_until_ready(MeanPallas(dim=1, min_pallas_bytes=0)(x))
    check(y, jnp.mean(x, axis=1), "pallas-middle-small")
    y = jax.block_until_ready(MeanPallas(dim=1, keepdim=True, min_pallas_bytes=0)(x))
    check(y, jnp.mean(x, axis=1, keepdims=True), "pallas-middle-keepdim")

    # 3) Leading (batch) axis; negative dim with a short trailing axis
    #    (short-R lane case intentionally routes to the XLA fallback).
    y = jax.block_until_ready(MeanPallas(dim=0, min_pallas_bytes=0)(x))
    check(y, jnp.mean(x, axis=0), "pallas-leading")
    y = jax.block_until_ready(MeanPallas(dim=-1)(x))
    check(y, jnp.mean(x, axis=-1), "short-trailing-fallback")

    # 4) Pallas lane-reduce path (trailing axis, R >= 128).
    xl = jax.random.normal(k2, (2, 4, 16, 256), dtype=jnp.float32)
    y = jax.block_until_ready(MeanPallas(dim=-1, min_pallas_bytes=0)(xl))
    check(y, jnp.mean(xl, axis=-1), "pallas-last")

    # 5) Pipelined, M-tiled ("parallel") path for a >1 MiB input; plus bf16.
    xm = jax.random.normal(k3, (64, 8, 32, 32), dtype=jnp.float32)
    y = jax.block_until_ready(MeanPallas(dim=1, min_pallas_bytes=0)(xm))
    check(y, jnp.mean(xm, axis=1), "pallas-middle-tiled")
    xb = xm.astype(jnp.bfloat16)
    y = jax.block_until_ready(MeanPallas(dim=1, min_pallas_bytes=0)(xb))
    ref_b = jnp.mean(xb.astype(jnp.float32), axis=1).astype(jnp.bfloat16)
    check(y, ref_b, "pallas-middle-bf16", rtol=2e-2, atol=2e-2)

    # 6) Reduction-axis (R) tiled accumulator paths, exercised with a small forced
    #    budget so shapes stay small (includes ragged R tails -> in-kernel masking).
    xr = jax.random.normal(k4, (16, 72, 128), dtype=jnp.float32)
    m = MeanPallas(dim=1, min_pallas_bytes=0, block_budget_bytes=64 * 1024)
    y = jax.block_until_ready(m(xr))
    check(y, jnp.mean(xr, axis=1), "pallas-middle-acc")

    xr2 = jax.random.normal(k4, (16, 200), dtype=jnp.float32)
    m = MeanPallas(dim=-1, min_pallas_bytes=0, block_budget_bytes=4 * 1024)
    y = jax.block_until_ready(m(xr2))
    check(y, jnp.mean(xr2, axis=-1), "pallas-last-acc")

    print("KERNEL_OK")
</pallas_src>

<mosaic_0001>
module attributes {stable_mosaic.version = 11 : i64} {
  func.func @_mean_axis1_kernel(%arg0: memref<2x4x256xf32, #tpu.memory_space<vmem>>, %arg1: memref<2x256xf32, #tpu.memory_space<vmem>>) attributes {dimension_semantics = [], scalar_prefetch = 0 : i64, scratch_operands = 0 : i64, tpu.core_type = #tpu.core_type<tc>} {
    %c0 = arith.constant 0 : index
    %c0_0 = arith.constant 0 : index
    %c0_1 = arith.constant 0 : index
    %0 = vector.load %arg0[%c0, %c0_0, %c0_1] : memref<2x4x256xf32, #tpu.memory_space<vmem>>, vector<2x4x256xf32>
    %cst = arith.constant dense<0.000000e+00> : vector<2x256xf32>
    %1 = vector.multi_reduction <add>, %0, %cst [1] : vector<2x4x256xf32> to vector<2x256xf32>
    %cst_2 = arith.constant 2.500000e-01 : f32
    %2 = vector.broadcast %cst_2 : f32 to vector<2x256xf32>
    %3 = arith.mulf %1, %2 : vector<2x256xf32>
    %c0_3 = arith.constant 0 : index
    %c0_4 = arith.constant 0 : index
    %4 = vector.load %arg1[%c0_3, %c0_4] : memref<2x256xf32, #tpu.memory_space<vmem>>, vector<2x256xf32>
    tpu.vector_store %arg1[%c0_3, %c0_4], %3 {strides = array<i32>} : memref<2x256xf32, #tpu.memory_space<vmem>>, vector<2x256xf32>,
    return
  }
}

</mosaic_0001>

<llo_original>
// kernel: tpu_custom_call.1
$region0: #{tpu_custom_call.1}
  #allocation0 [shape = 'u32[]', space=smem, size = 0x4, offset = 0x4, fixed_abs, tag = 'smem constant byte address 0x4 - core index']
  #allocation1 [shape = 'u32[144,128]{1,0:T(1,128)}', space=vmem, size = 0x12000, scoped, tag = 'internal scratch']
  %s0 = inlined_call_operand.hbm [shape: f32[2,4,256], index: 0, kind: input, shape index: {}]
  %s1 = inlined_call_operand.hbm [shape: f32[2,256], index: 1, kind: output, shape index: {}]
  %s2 = sld [smem:[#allocation0]]
  $region18: #{tpu_custom_call.1} parent=0
    _
  %s4 = ssub.s32 1, %s2
  %s5 = scalar_select 0, %s4, %s2
  $region1: #{tpu_custom_call.1} parent=0
    #allocation2 [shape = 'u8[8192]{0}', space=vmem, size = 0x2000, scoped, tag = 'input window, operand 0, single buffered']
    #allocation3 [shape = 's32[1]{0}', space=sflag, size = 0x4, scoped, tag = 'scoped memory for tpu_custom_call.1']
    #allocation4 [shape = 's32[1]{0}', space=sflag, size = 0x4, scoped, tag = 'scoped memory for tpu_custom_call.1']
    #allocation5 [shape = 'u8[2048]{0}', space=vmem, size = 0x800, scoped, tag = 'output window, operand 0, single buffered']
    %6 = vsyncpa [#allocation3], 0
    %7 = vsyncpa [#allocation4], 0
    // Predicated region
    $region2: #{tpu_custom_call.1} parent=1 // pred_check
      _
    $region3: #{tpu_custom_call.1} parent=1 // pred_check_branch
      %9 = sbr.rel (0) target = $region5
    $region4: #{tpu_custom_call.1} parent=1 // pred_region
      %s11 = ssub.s32 256, 256
      %12 = vsyncadd [#allocation3], %s11
      %s13 = sshll.u32 [#allocation2], 4
      %s14 = int_to_ptr.vmem [resolvable:$true] %s13
      %19 = dma.hbm_to_vmem [thread:$0]  %s0, 256, %s14, [#allocation3], 128, 128, 8
    $region5: #{tpu_custom_call.1} parent=1 // pred_fallthru
      _
    // Predicated region
    $region6: #{tpu_custom_call.1} parent=1 // pred_check
      _
    $region7: #{tpu_custom_call.1} parent=1 // pred_check_branch
      %21 = sbr.rel (0) target = $region9
    $region8: #{tpu_custom_call.1} parent=1 // pred_region
      %22 = dma.done [#allocation3], 256
    $region9: #{tpu_custom_call.1} parent=1 // pred_fallthru
      _
    %v23 = vld [vmem:[#allocation2] sm:$0xff]
    %v24 = vld [vmem:[#allocation2 + $0x8] sm:$0xff]
    %v27 = vcombine.high %v23, %v23
    %v28 = vcombine.high %v24, %v24
    %vm31 = vcmask 1043456
    %v32 = vsel %vm31, %v23, 0.0
    %v33 = vrot.slane %v32, 4
    %v34 = vadd.f32 %v32, %v33
    %v35 = vrot.slane %v34, 2
    %v36 = vadd.f32 %v34, %v35
    %v37 = vrot.slane %v36, 1
    %v38 = vadd.f32 %v36, %v37
    %v39 = vsel %vm31, %v27, 0.0
    %v40 = vrot.slane %v39, 4
    %v41 = vadd.f32 %v39, %v40
    %v42 = vrot.slane %v41, 2
    %v43 = vadd.f32 %v41, %v42
    %v44 = vrot.slane %v43, 1
    %v45 = vadd.f32 %v43, %v44
    %v46 = vsel %vm31, %v24, 0.0
    %v47 = vrot.slane %v46, 4
    %v48 = vadd.f32 %v46, %v47
    %v49 = vrot.slane %v48, 2
    %v50 = vadd.f32 %v48, %v49
    %v51 = vrot.slane %v50, 1
    %v52 = vadd.f32 %v50, %v51
    %v53 = vsel %vm31, %v28, 0.0
    %v54 = vrot.slane %v53, 4
    %v55 = vadd.f32 %v53, %v54
    %v56 = vrot.slane %v55, 2
    %v57 = vadd.f32 %v55, %v56
    %v58 = vrot.slane %v57, 1
    %v59 = vadd.f32 %v57, %v58
    %v60 = vmul.f32 %v38, 0.25
    %v61 = vmul.f32 %v45, 0.25
    %v62 = vmul.f32 %v52, 0.25
    %v63 = vmul.f32 %v59, 0.25
    %v68 = vcombine.low %v60, %v61
    %v70 = vunpack.c.l.s4 1983009808
    %v71 = vunpack.c.0.s8 %v70
    %v72 = vlaneseq
    %v73 = vshrl.u32 %v72, 7
    %v74 = vsub.s32 %v71, %v73
    %v75 = vrot.slane %v68, %v74
    %v76 = vcombine.low %v62, %v63
    %v78 = vunpack.c.l.s4 1983009808
    %v79 = vunpack.c.0.s8 %v78
    %v80 = vlaneseq
    %v81 = vshrl.u32 %v80, 7
    %v82 = vsub.s32 %v79, %v81
    %v83 = vrot.slane %v76, %v82
    %vm84 = vcmask 1044484
    %v85 = vsel %vm84, %v75, %v75
    %vm86 = vcmask 1046534
    %v87 = vsel %vm86, %v75, %v85
    %v88 = vrot.slane %v83, 7
    %vm89 = vcmask 1041409
    %v90 = vsel %vm89, %v88, %v87
    %vm91 = vcmask 1043459
    %v92 = vsel %vm91, %v88, %v90
    %vm93 = vcmask 1045509
    %v94 = vsel %vm93, %v88, %v92
    %vm95 = vcmask 1047559
    %v96 = vsel %vm95, %v88, %v94
    %98 = vst [vmem:[#allocation5] sm:$0xf] %v96
    // Predicated region
    $region10: #{tpu_custom_call.1} parent=1 // pred_check
      _
    $region11: #{tpu_custom_call.1} parent=1 // pred_check_branch
      %100 = sbr.rel (0) target = $region13
    $region12: #{tpu_custom_call.1} parent=1 // pred_region
      %s102 = ssub.s32 64, 64
      %103 = vsyncadd [#allocation4], %s102
      %s105 = sshll.u32 [#allocation5], 4
      %s106 = int_to_ptr.vmem [resolvable:$true] %s105
      %108 = dma.vmem_to_hbm [thread:$0]  %s106, 64, %s1, [#allocation4]
    $region13: #{tpu_custom_call.1} parent=1 // pred_fallthru
      _
    // Predicated region
    $region14: #{tpu_custom_call.1} parent=1 // pred_check
      _
    $region15: #{tpu_custom_call.1} parent=1 // pred_check_branch
      %110 = sbr.rel (0) target = $region17
    $region16: #{tpu_custom_call.1} parent=1 // pred_region
      %111 = dma.done [#allocation4], 64
    $region17: #{tpu_custom_call.1} parent=1 // pred_fallthru
      _
    %112 = vsyncpa [#allocation3], 1
    %113 = vsyncpa [#allocation4], 1

</llo_original>
